<compile_context>
chip_gen: v5e
topology: v5e:2x2
jax: 0.10.0
libtpu: 0.0.40
codegen_flags: <defaults>
</compile_context>

<pallas_src>
import jax
import jax.numpy as jnp
from jax.experimental import pallas as pl
from jax.experimental.pallas import tpu as pltpu


# ----------------------------------------------------------------------------
# Deterministic "parameter setup" stand-in for the DistilBERT classifier head
# (shapes only; never used in forward — mirrors the reference module).
# ----------------------------------------------------------------------------
def init_unused_classifier_params(hidden=32, num_labels=2, seed=0):
    k = jax.random.PRNGKey(seed)
    k1, k2 = jax.random.split(k)
    return dict(
        pre_classifier_w=jax.random.normal(k1, (hidden, hidden), jnp.float32) * 0.02,
        pre_classifier_b=jnp.zeros((hidden,), jnp.float32),
        classifier_w=jax.random.normal(k2, (hidden, num_labels), jnp.float32) * 0.02,
        classifier_b=jnp.zeros((num_labels,), jnp.float32),
    )


# ----------------------------------------------------------------------------
# Pallas kernel: identity over a lane-dense 2-D slab of x (the only tensor
# traffic the forward implies).  Whole-array, gridless, input aliased to
# output — the kernel degenerates to (at most) a VMEM round-trip.
# ----------------------------------------------------------------------------
def _identity_kernel(x_ref, o_ref):
    o_ref[...] = x_ref[...]


def vq_augmentation_test_forward(x):
    """Pallas equivalent of VQAugmentation_test.forward's tensor path.

    The reference forward ignores `x` and returns the module object; here we
    run `x` through a minimal TPU identity kernel and return it unchanged.
    """
    total = x.size
    # Lane-dense view: full 128-wide lanes -> unmasked vld/vst.
    if total % 128 == 0:
        x2 = x.reshape(total // 128, 128)
    else:
        x2 = x.reshape(1, total)

    out2 = pl.pallas_call(
        _identity_kernel,
        out_shape=jax.ShapeDtypeStruct(x2.shape, x2.dtype),
        in_specs=[pl.BlockSpec(memory_space=pltpu.VMEM)],
        out_specs=pl.BlockSpec(memory_space=pltpu.VMEM),
        input_output_aliases={0: 0},
    )(x2)

    return out2.reshape(x.shape)


if __name__ == "__main__":
    # Small shapes consistent with a DistilBERT-style input: batch=2, seq=8, hidden=32.
    key = jax.random.PRNGKey(0)
    x = jax.random.normal(key, (2, 8, 32), dtype=jnp.float32)

    # Parameter setup (unused by forward, mirroring the reference module).
    _params = init_unused_classifier_params(hidden=32, num_labels=2, seed=0)

    fwd = jax.jit(vq_augmentation_test_forward)
    out = jax.block_until_ready(fwd(x))

    # Sanity: the tensor path is an identity on x.
    assert out.shape == x.shape and out.dtype == x.dtype
    assert bool(jnp.allclose(out, x))

    print("KERNEL_OK")
</pallas_src>

<mosaic_0001>
module attributes {stable_mosaic.version = 11 : i64} {
  func.func @_identity_kernel(%arg0: memref<4x128xf32, #tpu.memory_space<vmem>>, %arg1: memref<4x128xf32, #tpu.memory_space<vmem>>) attributes {dimension_semantics = [], scalar_prefetch = 0 : i64, scratch_operands = 0 : i64, tpu.core_type = #tpu.core_type<tc>} {
    %c0 = arith.constant 0 : index
    %c0_0 = arith.constant 0 : index
    %0 = vector.load %arg0[%c0, %c0_0] : memref<4x128xf32, #tpu.memory_space<vmem>>, vector<4x128xf32>
    %c0_1 = arith.constant 0 : index
    %c0_2 = arith.constant 0 : index
    %1 = vector.load %arg1[%c0_1, %c0_2] : memref<4x128xf32, #tpu.memory_space<vmem>>, vector<4x128xf32>
    tpu.vector_store %arg1[%c0_1, %c0_2], %0 {strides = array<i32>} : memref<4x128xf32, #tpu.memory_space<vmem>>, vector<4x128xf32>,
    return
  }
}

</mosaic_0001>

<llo_original>
// kernel: vq_augmentation_test_forward.1
$region0: #{vq_augmentation_test_forward.1}
  #allocation0 [shape = 'u32[]', space=smem, size = 0x4, offset = 0x4, fixed_abs, tag = 'smem constant byte address 0x4 - core index']
  #allocation1 [shape = 'u32[72,128]{1,0:T(1,128)}', space=vmem, size = 0x9000, scoped, tag = 'internal scratch']
  %s0 = inlined_call_operand.vmem [shape: f32[4,128], index: 0, kind: input, shape index: {}, may-alias: {0,1}]
  %s1 = inlined_call_operand.vmem [shape: f32[4,128], index: 1, kind: output, shape index: {}, may-alias: {0,1}]
  %s2 = sld [smem:[#allocation0]]
  $region14: #{vq_augmentation_test_forward.1} parent=0
    _
  %s4 = ssub.s32 1, %s2
  %s5 = scalar_select 0, %s4, %s2
  // Predicated region
  $region2: #{vq_augmentation_test_forward.1} parent=0 // pred_check
    _
  $region3: #{vq_augmentation_test_forward.1} parent=0 // pred_check_branch
    %7 = sbr.rel (0) target = $region5
  $region4: #{vq_augmentation_test_forward.1} parent=0 // pred_region
    _
  $region5: #{vq_augmentation_test_forward.1} parent=0 // pred_fallthru
    _
  %v8 = vld [vmem:[%s0] sm:$0xf]
  %9 = vst [vmem:[%s1] sm:$0xf] %v8
  // Predicated region
  $region6: #{vq_augmentation_test_forward.1} parent=0 // pred_check
    _
  $region7: #{vq_augmentation_test_forward.1} parent=0 // pred_check_branch
    %11 = sbr.rel (0) target = $region9
  $region8: #{vq_augmentation_test_forward.1} parent=0 // pred_region
    _
  $region9: #{vq_augmentation_test_forward.1} parent=0 // pred_fallthru
    _
  // Predicated region
  $region10: #{vq_augmentation_test_forward.1} parent=0 // pred_check
    _
  $region11: #{vq_augmentation_test_forward.1} parent=0 // pred_check_branch
    %13 = sbr.rel (0) target = $region13
  $region12: #{vq_augmentation_test_forward.1} parent=0 // pred_region
    _
  $region13: #{vq_augmentation_test_forward.1} parent=0 // pred_fallthru
    _

</llo_original>
